<compile_context>
chip_gen: v7x
topology: tpu7x:2x2x1
jax: 0.10.0
libtpu: 0.0.40
codegen_flags: <defaults>
</compile_context>

<pallas_src>
import functools

import jax
import jax.numpy as jnp
from jax.experimental import pallas as pl
from jax.experimental.pallas import tpu as pltpu

IN_F = 48
HID = 32
OUT_F = 48
BN_EPS = 1e-5

_TILE_CAP = 8192          # rows per grid step on the tiled path (multiple of 8)
_SINGLE_SHOT_CAP = 16384  # largest batch kept fully VMEM-resident (~10 MiB live)
_VMEM_LIMIT = 32 * 1024 * 1024


# --------------------------------------------------------------------------- #
# Small/medium-batch fast path: one dispatch, whole batch resident in VMEM.
# --------------------------------------------------------------------------- #
def _single_shot_kernel(x_ref, w1_ref, b1_ref, w2_ref, b2_ref,
                        gamma_ref, beta_ref, w4_ref, b4_ref, o_ref):
    x = x_ref[...]                                                     # (N, 48)
    h1 = jnp.maximum(
        jnp.dot(x, w1_ref[...], preferred_element_type=jnp.float32) + b1_ref[...],
        0.0)
    h2 = jnp.dot(h1, w2_ref[...], preferred_element_type=jnp.float32) + b2_ref[...]

    # Training-mode BatchNorm1d (biased batch variance), centered form.
    mean = jnp.mean(h2, axis=0, keepdims=True)                         # (1, 32)
    centered = h2 - mean
    var = jnp.mean(centered * centered, axis=0, keepdims=True)         # (1, 32)
    inv_std = jax.lax.rsqrt(var + BN_EPS)
    h2 = jnp.maximum(centered * (inv_std * gamma_ref[...]) + beta_ref[...], 0.0)

    out = jnp.dot(h2, w4_ref[...], preferred_element_type=jnp.float32) + b4_ref[...]
    o_ref[...] = jax.nn.sigmoid(out)


# --------------------------------------------------------------------------- #
# Large-batch path, pass 1: per-tile partial BN statistics (packed output).
# --------------------------------------------------------------------------- #
def _stats_kernel(x_ref, w1_ref, b1_ref, w2_ref, b2_ref, stats_ref,
                  *, n_total, tile):
    i = pl.program_id(0)
    x = x_ref[...]                                                     # (tile, 48)
    h1 = jnp.maximum(
        jnp.dot(x, w1_ref[...], preferred_element_type=jnp.float32) + b1_ref[...],
        0.0)
    h2 = jnp.dot(h1, w2_ref[...], preferred_element_type=jnp.float32) + b2_ref[...]

    # Mask rows past the true batch size (padded last partial tile) so they
    # don't bias the batch statistics.
    row = jax.lax.broadcasted_iota(jnp.int32, (tile, 1), 0) + i * tile
    h2 = jnp.where(row < n_total, h2, 0.0)

    s = jnp.sum(h2, axis=0, keepdims=True)                             # (1, 32)
    sq = jnp.sum(h2 * h2, axis=0, keepdims=True)                       # (1, 32)
    stats_ref[...] = jnp.concatenate([s, sq], axis=0)[None]            # (1, 2, 32)


# --------------------------------------------------------------------------- #
# Large-batch path, pass 2: full forward with BN folded into scale/shift.
# --------------------------------------------------------------------------- #
def _apply_kernel(x_ref, w1_ref, b1_ref, w2_ref, b2_ref, scale_ref, shift_ref,
                  w4_ref, b4_ref, o_ref):
    x = x_ref[...]
    h1 = jnp.maximum(
        jnp.dot(x, w1_ref[...], preferred_element_type=jnp.float32) + b1_ref[...],
        0.0)
    h2 = jnp.dot(h1, w2_ref[...], preferred_element_type=jnp.float32) + b2_ref[...]
    h2 = jnp.maximum(h2 * scale_ref[...] + shift_ref[...], 0.0)        # BN + ReLU
    out = jnp.dot(h2, w4_ref[...], preferred_element_type=jnp.float32) + b4_ref[...]
    o_ref[...] = jax.nn.sigmoid(out)


def fully_connected(x, params):
    """x: (N, 48) float32 -> (N, 48) float32 (PyTorch forward, training-mode BN)."""
    w1, b1, w2, b2, gamma, beta, w4, b4 = params
    n = x.shape[0]

    # ---------------- small/medium batch: single fused dispatch ------------- #
    if n <= _SINGLE_SHOT_CAP:
        return pl.pallas_call(
            _single_shot_kernel,
            out_shape=jax.ShapeDtypeStruct((n, OUT_F), jnp.float32),
            compiler_params=pltpu.CompilerParams(vmem_limit_bytes=_VMEM_LIMIT),
        )(x, w1, b1, w2, b2, gamma, beta, w4, b4)

    # ---------------- large batch: tiled two-pass structure ----------------- #
    tile = _TILE_CAP
    num_tiles = pl.cdiv(n, tile)

    cparams = pltpu.CompilerParams(
        dimension_semantics=("parallel",),      # row-parallel (megacore on v7x)
        vmem_limit_bytes=_VMEM_LIMIT,
    )

    def const(shape):
        return pl.BlockSpec(shape, lambda i, _nd=len(shape): (0,) * _nd)

    row_in_spec = pl.BlockSpec((tile, IN_F), lambda i: (i, 0))

    # pass 1: packed per-tile partial (sum, sum-of-squares) of h2
    stats = pl.pallas_call(
        functools.partial(_stats_kernel, n_total=n, tile=tile),
        out_shape=jax.ShapeDtypeStruct((num_tiles, 2, HID), jnp.float32),
        grid=(num_tiles,),
        in_specs=[
            row_in_spec,
            const((IN_F, HID)), const((1, HID)),
            const((HID, HID)), const((1, HID)),
        ],
        out_specs=pl.BlockSpec((1, 2, HID), lambda i: (i, 0, 0)),
        compiler_params=cparams,
    )(x, w1, b1, w2, b2)

    # tiny cross-tile reduction + folded BN affine (64 floats, plain JAX)
    total = jnp.sum(stats, axis=0)                          # (2, 32)
    mean = total[0] / n
    var = jnp.maximum(total[1] / n - mean * mean, 0.0)      # biased variance
    inv_std = jax.lax.rsqrt(var + BN_EPS)
    g = gamma.reshape(-1)
    scale = (inv_std * g).reshape(1, HID)
    shift = (beta.reshape(-1) - mean * inv_std * g).reshape(1, HID)

    # pass 2: recompute h1/h2, apply folded BN + ReLU, layer4, sigmoid
    return pl.pallas_call(
        _apply_kernel,
        out_shape=jax.ShapeDtypeStruct((n, OUT_F), jnp.float32),
        grid=(num_tiles,),
        in_specs=[
            row_in_spec,
            const((IN_F, HID)), const((1, HID)),
            const((HID, HID)), const((1, HID)),
            const((1, HID)), const((1, HID)),
            const((HID, OUT_F)), const((1, OUT_F)),
        ],
        out_specs=pl.BlockSpec((tile, OUT_F), lambda i: (i, 0)),
        compiler_params=cparams,
    )(x, w1, b1, w2, b2, scale, shift, w4, b4)


def init_params(key):
    """Deterministic parameter init mimicking PyTorch Linear/BatchNorm shapes."""
    k1, k2, k3, k4, k5, k6 = jax.random.split(key, 6)

    def linear(kw, kb, fan_in, fan_out):
        bound = 1.0 / jnp.sqrt(jnp.float32(fan_in))
        w = jax.random.uniform(kw, (fan_in, fan_out), jnp.float32, -bound, bound)
        b = jax.random.uniform(kb, (1, fan_out), jnp.float32, -bound, bound)
        return w, b

    w1, b1 = linear(k1, k2, IN_F, HID)
    w2, b2 = linear(k3, k4, HID, HID)
    w4, b4 = linear(k5, k6, HID, OUT_F)
    gamma = jnp.ones((1, HID), jnp.float32)    # BatchNorm1d weight init
    beta = jnp.zeros((1, HID), jnp.float32)    # BatchNorm1d bias init
    return (w1, b1, w2, b2, gamma, beta, w4, b4)


def _reference(x, params):
    """Pure-JAX reference with identical semantics (sanity check)."""
    w1, b1, w2, b2, gamma, beta, w4, b4 = params
    h1 = jnp.maximum(x @ w1 + b1, 0.0)
    h2 = h1 @ w2 + b2
    mean = h2.mean(axis=0, keepdims=True)
    var = ((h2 - mean) ** 2).mean(axis=0, keepdims=True)
    h2n = (h2 - mean) / jnp.sqrt(var + BN_EPS) * gamma + beta
    h2r = jnp.maximum(h2n, 0.0)
    return jax.nn.sigmoid(h2r @ w4 + b4)


# TODO(synk): PyTorch BatchNorm1d also updates running_mean/running_var as a
# side effect in training; only the forward output is reproduced here.

if __name__ == "__main__":
    key = jax.random.PRNGKey(0)
    kx, kp, kb = jax.random.split(key, 3)

    # Small shape consistent with the module: batch=8 rows of 48 features
    # (hits the single-dispatch fast path).
    batch = 8
    x = jax.random.normal(kx, (batch, IN_F), jnp.float32)
    params = init_params(kp)

    out = jax.block_until_ready(fully_connected(x, params))
    ref = _reference(x, params)
    assert out.shape == (batch, OUT_F)
    assert jnp.allclose(out, ref, atol=1e-5, rtol=1e-5), \
        float(jnp.max(jnp.abs(out - ref)))

    # Exercise the tiled two-pass path, including the masked partial last tile.
    n_big = 2 * _TILE_CAP + 24
    x_big = jax.random.normal(kb, (n_big, IN_F), jnp.float32)
    out_big = jax.block_until_ready(fully_connected(x_big, params))
    ref_big = _reference(x_big, params)
    assert out_big.shape == (n_big, OUT_F)
    assert jnp.allclose(out_big, ref_big, atol=1e-4, rtol=1e-4), \
        float(jnp.max(jnp.abs(out_big - ref_big)))

    print("KERNEL_OK")
</pallas_src>

<mosaic_0001>
module attributes {stable_mosaic.version = 11 : i64} {
  func.func @_single_shot_kernel(%arg0: memref<8x48xf32, #tpu.memory_space<vmem>>, %arg1: memref<48x32xf32, #tpu.memory_space<vmem>>, %arg2: memref<1x32xf32, #tpu.memory_space<vmem>>, %arg3: memref<32x32xf32, #tpu.memory_space<vmem>>, %arg4: memref<1x32xf32, #tpu.memory_space<vmem>>, %arg5: memref<1x32xf32, #tpu.memory_space<vmem>>, %arg6: memref<1x32xf32, #tpu.memory_space<vmem>>, %arg7: memref<32x48xf32, #tpu.memory_space<vmem>>, %arg8: memref<1x48xf32, #tpu.memory_space<vmem>>, %arg9: memref<8x48xf32, #tpu.memory_space<vmem>>) attributes {dimension_semantics = [], scalar_prefetch = 0 : i64, scratch_operands = 0 : i64, tpu.core_type = #tpu.core_type<tc>} {
    %c0 = arith.constant 0 : index
    %c0_0 = arith.constant 0 : index
    %0 = vector.load %arg0[%c0, %c0_0] : memref<8x48xf32, #tpu.memory_space<vmem>>, vector<8x48xf32>
    %c0_1 = arith.constant 0 : index
    %c0_2 = arith.constant 0 : index
    %1 = vector.load %arg1[%c0_1, %c0_2] : memref<48x32xf32, #tpu.memory_space<vmem>>, vector<48x32xf32>
    %cst = arith.constant dense<0.000000e+00> : vector<8x32xf32>
    %2 = tpu.matmul %0, %1, %cst {dimension_numbers = #tpu.dot_dimension_numbers<[1], [0], [0], [1], [0, 0, 1, 1], [], []>} : vector<8x48xf32>, vector<48x32xf32>, vector<8x32xf32> -> vector<8x32xf32>
    %c0_3 = arith.constant 0 : index
    %c0_4 = arith.constant 0 : index
    %3 = vector.load %arg2[%c0_3, %c0_4] : memref<1x32xf32, #tpu.memory_space<vmem>>, vector<1x32xf32>
    %4 = vector.broadcast %3 : vector<1x32xf32> to vector<8x32xf32>
    %5 = arith.addf %2, %4 : vector<8x32xf32>
    %cst_5 = arith.constant 0.000000e+00 : f32
    %6 = vector.broadcast %cst_5 : f32 to vector<8x32xf32>
    %7 = arith.maximumf %5, %6 : vector<8x32xf32>
    %c0_6 = arith.constant 0 : index
    %c0_7 = arith.constant 0 : index
    %8 = vector.load %arg3[%c0_6, %c0_7] : memref<32x32xf32, #tpu.memory_space<vmem>>, vector<32x32xf32>
    %cst_8 = arith.constant dense<0.000000e+00> : vector<8x32xf32>
    %9 = tpu.matmul %7, %8, %cst_8 {dimension_numbers = #tpu.dot_dimension_numbers<[1], [0], [0], [1], [0, 0, 1, 1], [], []>} : vector<8x32xf32>, vector<32x32xf32>, vector<8x32xf32> -> vector<8x32xf32>
    %c0_9 = arith.constant 0 : index
    %c0_10 = arith.constant 0 : index
    %10 = vector.load %arg4[%c0_9, %c0_10] : memref<1x32xf32, #tpu.memory_space<vmem>>, vector<1x32xf32>
    %11 = vector.broadcast %10 : vector<1x32xf32> to vector<8x32xf32>
    %12 = arith.addf %9, %11 : vector<8x32xf32>
    %cst_11 = arith.constant dense<0.000000e+00> : vector<32xf32>
    %13 = vector.multi_reduction <add>, %12, %cst_11 [0] : vector<8x32xf32> to vector<32xf32>
    %14 = vector.shape_cast %13 : vector<32xf32> to vector<1x32xf32>
    %cst_12 = arith.constant 8.000000e+00 : f32
    %15 = vector.broadcast %cst_12 : f32 to vector<1x32xf32>
    %16 = arith.divf %14, %15 : vector<1x32xf32>
    %17 = vector.broadcast %16 : vector<1x32xf32> to vector<8x32xf32>
    %18 = arith.subf %12, %17 : vector<8x32xf32>
    %19 = arith.mulf %18, %18 : vector<8x32xf32>
    %cst_13 = arith.constant dense<0.000000e+00> : vector<32xf32>
    %20 = vector.multi_reduction <add>, %19, %cst_13 [0] : vector<8x32xf32> to vector<32xf32>
    %21 = vector.shape_cast %20 : vector<32xf32> to vector<1x32xf32>
    %cst_14 = arith.constant 8.000000e+00 : f32
    %22 = vector.broadcast %cst_14 : f32 to vector<1x32xf32>
    %23 = arith.divf %21, %22 : vector<1x32xf32>
    %cst_15 = arith.constant 9.99999974E-6 : f32
    %24 = vector.broadcast %cst_15 : f32 to vector<1x32xf32>
    %25 = arith.addf %23, %24 : vector<1x32xf32>
    %26 = math.rsqrt %25 : vector<1x32xf32>
    %c0_16 = arith.constant 0 : index
    %c0_17 = arith.constant 0 : index
    %27 = vector.load %arg5[%c0_16, %c0_17] : memref<1x32xf32, #tpu.memory_space<vmem>>, vector<1x32xf32>
    %28 = arith.mulf %26, %27 : vector<1x32xf32>
    %29 = vector.broadcast %28 : vector<1x32xf32> to vector<8x32xf32>
    %30 = arith.mulf %18, %29 : vector<8x32xf32>
    %c0_18 = arith.constant 0 : index
    %c0_19 = arith.constant 0 : index
    %31 = vector.load %arg6[%c0_18, %c0_19] : memref<1x32xf32, #tpu.memory_space<vmem>>, vector<1x32xf32>
    %32 = vector.broadcast %31 : vector<1x32xf32> to vector<8x32xf32>
    %33 = arith.addf %30, %32 : vector<8x32xf32>
    %cst_20 = arith.constant 0.000000e+00 : f32
    %34 = vector.broadcast %cst_20 : f32 to vector<8x32xf32>
    %35 = arith.maximumf %33, %34 : vector<8x32xf32>
    %c0_21 = arith.constant 0 : index
    %c0_22 = arith.constant 0 : index
    %36 = vector.load %arg7[%c0_21, %c0_22] : memref<32x48xf32, #tpu.memory_space<vmem>>, vector<32x48xf32>
    %cst_23 = arith.constant dense<0.000000e+00> : vector<8x48xf32>
    %37 = tpu.matmul %35, %36, %cst_23 {dimension_numbers = #tpu.dot_dimension_numbers<[1], [0], [0], [1], [0, 0, 1, 1], [], []>} : vector<8x32xf32>, vector<32x48xf32>, vector<8x48xf32> -> vector<8x48xf32>
    %c0_24 = arith.constant 0 : index
    %c0_25 = arith.constant 0 : index
    %38 = vector.load %arg8[%c0_24, %c0_25] : memref<1x48xf32, #tpu.memory_space<vmem>>, vector<1x48xf32>
    %39 = vector.broadcast %38 : vector<1x48xf32> to vector<8x48xf32>
    %40 = arith.addf %37, %39 : vector<8x48xf32>
    %41 = arith.negf %40 : vector<8x48xf32>
    %42 = math.exp %41 : vector<8x48xf32>
    %cst_26 = arith.constant 1.000000e+00 : f32
    %43 = vector.broadcast %cst_26 : f32 to vector<8x48xf32>
    %44 = arith.addf %43, %42 : vector<8x48xf32>
    %45 = arith.divf %43, %44 : vector<8x48xf32>
    %c0_27 = arith.constant 0 : index
    %c0_28 = arith.constant 0 : index
    %46 = vector.load %arg9[%c0_27, %c0_28] : memref<8x48xf32, #tpu.memory_space<vmem>>, vector<8x48xf32>
    tpu.vector_store %arg9[%c0_27, %c0_28], %45 {strides = array<i32>} : memref<8x48xf32, #tpu.memory_space<vmem>>, vector<8x48xf32>,
    return
  }
}

</mosaic_0001>

<llo_original>
// kernel: tpu_custom_call.1
$region0: #{tpu_custom_call.1}
  #allocation0 [shape = 'u32[]', space=smem, size = 0x4, offset = 0x4, fixed_abs, tag = 'smem constant byte address 0x4 - core index']
  #allocation1 [shape = 'u32[144,128]{1,0:T(1,128)}', space=vmem, size = 0x12000, scoped, tag = 'internal scratch']
  %s0 = inlined_call_operand.vmem [shape: f32[8,48], index: 0, kind: input, shape index: {}]
  %s1 = inlined_call_operand.vmem [shape: f32[48,32], index: 1, kind: input, shape index: {}]
  %s2 = inlined_call_operand.vmem [shape: f32[1,32], index: 2, kind: input, shape index: {}]
  %s3 = inlined_call_operand.vmem [shape: f32[32,32], index: 3, kind: input, shape index: {}]
  %s4 = inlined_call_operand.vmem [shape: f32[1,32], index: 4, kind: input, shape index: {}]
  %s5 = inlined_call_operand.vmem [shape: f32[1,32], index: 5, kind: input, shape index: {}]
  %s6 = inlined_call_operand.vmem [shape: f32[1,32], index: 6, kind: input, shape index: {}]
  %s7 = inlined_call_operand.vmem [shape: f32[32,48], index: 7, kind: input, shape index: {}]
  %s8 = inlined_call_operand.vmem [shape: f32[1,48], index: 8, kind: input, shape index: {}]
  %s9 = inlined_call_operand.hbm [shape: f32[8,48], index: 9, kind: output, shape index: {}]
  %s10 = sld [smem:[#allocation0]]
  $region46: #{tpu_custom_call.1} parent=0
    _
  %s12 = ssub.s32 1, %s10
  %s13 = scalar_select 0, %s12, %s10
  $region1: #{tpu_custom_call.1} parent=0
    #allocation2 [shape = 'u8[4096]{0}', space=vmem, size = 0x1000, scoped, tag = 'output window, operand 0, single buffered']
    #allocation3 [shape = 's32[1]{0}', space=sflag, size = 0x4, scoped, tag = 'scoped memory for tpu_custom_call.1']
    %14 = vsyncpa [#allocation3], 0
    // Predicated region
    $region2: #{tpu_custom_call.1} parent=1 // pred_check
      _
    $region3: #{tpu_custom_call.1} parent=1 // pred_check_branch
      %16 = sbr.rel (0) target = $region5
    $region4: #{tpu_custom_call.1} parent=1 // pred_region
      _
    $region5: #{tpu_custom_call.1} parent=1 // pred_fallthru
      _
    // Predicated region
    $region6: #{tpu_custom_call.1} parent=1 // pred_check
      _
    $region7: #{tpu_custom_call.1} parent=1 // pred_check_branch
      %18 = sbr.rel (0) target = $region9
    $region8: #{tpu_custom_call.1} parent=1 // pred_region
      _
    $region9: #{tpu_custom_call.1} parent=1 // pred_fallthru
      _
    // Predicated region
    $region10: #{tpu_custom_call.1} parent=1 // pred_check
      _
    $region11: #{tpu_custom_call.1} parent=1 // pred_check_branch
      %20 = sbr.rel (0) target = $region13
    $region12: #{tpu_custom_call.1} parent=1 // pred_region
      _
    $region13: #{tpu_custom_call.1} parent=1 // pred_fallthru
      _
    // Predicated region
    $region14: #{tpu_custom_call.1} parent=1 // pred_check
      _
    $region15: #{tpu_custom_call.1} parent=1 // pred_check_branch
      %22 = sbr.rel (0) target = $region17
    $region16: #{tpu_custom_call.1} parent=1 // pred_region
      _
    $region17: #{tpu_custom_call.1} parent=1 // pred_fallthru
      _
    // Predicated region
    $region18: #{tpu_custom_call.1} parent=1 // pred_check
      _
    $region19: #{tpu_custom_call.1} parent=1 // pred_check_branch
      %24 = sbr.rel (0) target = $region21
    $region20: #{tpu_custom_call.1} parent=1 // pred_region
      _
    $region21: #{tpu_custom_call.1} parent=1 // pred_fallthru
      _
    // Predicated region
    $region22: #{tpu_custom_call.1} parent=1 // pred_check
      _
    $region23: #{tpu_custom_call.1} parent=1 // pred_check_branch
      %26 = sbr.rel (0) target = $region25
    $region24: #{tpu_custom_call.1} parent=1 // pred_region
      _
    $region25: #{tpu_custom_call.1} parent=1 // pred_fallthru
      _
    // Predicated region
    $region26: #{tpu_custom_call.1} parent=1 // pred_check
      _
    $region27: #{tpu_custom_call.1} parent=1 // pred_check_branch
      %28 = sbr.rel (0) target = $region29
    $region28: #{tpu_custom_call.1} parent=1 // pred_region
      _
    $region29: #{tpu_custom_call.1} parent=1 // pred_fallthru
      _
    // Predicated region
    $region30: #{tpu_custom_call.1} parent=1 // pred_check
      _
    $region31: #{tpu_custom_call.1} parent=1 // pred_check_branch
      %30 = sbr.rel (0) target = $region33
    $region32: #{tpu_custom_call.1} parent=1 // pred_region
      _
    $region33: #{tpu_custom_call.1} parent=1 // pred_fallthru
      _
    // Predicated region
    $region34: #{tpu_custom_call.1} parent=1 // pred_check
      _
    $region35: #{tpu_custom_call.1} parent=1 // pred_check_branch
      %32 = sbr.rel (0) target = $region37
    $region36: #{tpu_custom_call.1} parent=1 // pred_region
      _
    $region37: #{tpu_custom_call.1} parent=1 // pred_fallthru
      _
    %v33 = vld [vmem:[%s0] sm:$0xff]
    %v34 = vld [vmem:[%s1] sm:$0xff]
    %v35 = vld [vmem:[%s1 + $0x8] sm:$0xff]
    %v36 = vld [vmem:[%s1 + $0x10] sm:$0xff]
    %v37 = vld [vmem:[%s1 + $0x18] sm:$0xff]
    %v38 = vld [vmem:[%s1 + $0x20] sm:$0xff]
    %v39 = vld [vmem:[%s1 + $0x28] sm:$0xff]
    %v40 = vld [vmem:[%s2] sm:$0x1]
    %v42 = vlaneseq
    %v43 = vshrl.u32 %v42, 7
    %v44 = vsub.s32 0, %v43
    %v45 = vrot.slane %v40, %v44
    %vm47 = vcmask 392192
    %v49 = vsel %vm47, %v33, 0
    %51 = vmatprep.subr.mxu0 0.0
    %52 = vmatpush1.msra.mxu0 %v34
    %53 = vmatprep.subr.mxu0 0.0
    %54 = vmatpush1.msra.mxu0 %v35
    %55 = vmatprep.subr.mxu0 0.0
    %56 = vmatpush1.msra.mxu0 %v36
    %57 = vmatprep.subr.mxu0 0.0
    %58 = vmatpush1.msra.mxu0 %v37
    %59 = vmatprep.subr.mxu0 0.0
    %60 = vmatpush1.msra.mxu0 %v38
    %61 = vmatprep.subr.mxu0 0.0
    %62 = vmatpush1.msra.mxu0 %v39
    %63 = vmatprep.subr.mxu0 0.0
    %64 = vmatpush1.msra.mxu0 0.0
    %65 = vmatprep.subr.mxu0 0.0
    %66 = vmatpush1.msra.mxu0 0.0
    %67 = vmatprep.subr.mxu0 0.0
    %68 = vmatpush1.msra.mxu0 0.0
    %69 = vmatprep.subr.mxu0 0.0
    %70 = vmatpush1.msra.mxu0 0.0
    %71 = vmatprep.subr.mxu0 0.0
    %72 = vmatpush1.msra.mxu0 0.0
    %73 = vmatprep.subr.mxu0 0.0
    %74 = vmatpush1.msra.mxu0 0.0
    %75 = vmatprep.subr.mxu0 0.0
    %76 = vmatpush1.msra.mxu0 0.0
    %77 = vmatprep.subr.mxu0 0.0
    %78 = vmatpush1.msra.mxu0 0.0
    %79 = vmatprep.subr.mxu0 0.0
    %80 = vmatpush1.msra.mxu0 0.0
    %81 = vmatprep.subr.mxu0 0.0
    %82 = vmatpush1.msra.mxu0 0.0
    %83 = vmatprep.subr.mxu0 0.0
    %84 = vmatpush1.msra.mxu0 0.0
    %85 = vmatprep.subr.mxu0 0.0
    %86 = vmatpush1.msra.mxu0 0.0
    %87 = vmatprep.subr.mxu0 0.0
    %88 = vmatpush1.msra.mxu0 0.0
    %89 = vmatprep.subr.mxu0 0.0
    %90 = vmatpush1.msra.mxu0 0.0
    %91 = vmatprep.subr.mxu0 0.0
    %92 = vmatpush1.msra.mxu0 0.0
    %93 = vmatprep.subr.mxu0 0.0
    %94 = vmatpush1.msra.mxu0 0.0
    %95 = vmatprep.subr.mxu0 0.0
    %96 = vmatpush1.msra.mxu0 0.0
    %97 = vmatprep.subr.mxu0 0.0
    %98 = vmatpush1.msra.mxu0 0.0
    %99 = vmatprep.subr.mxu0 0.0
    %100 = vmatpush1.msra.mxu0 0.0
    %101 = vmatprep.subr.mxu0 0.0
    %102 = vmatpush1.msra.mxu0 0.0
    %103 = vmatprep.subr.mxu0 0.0
    %104 = vmatpush1.msra.mxu0 0.0
    %105 = vmatprep.subr.mxu0 0.0
    %106 = vmatpush1.msra.mxu0 0.0
    %107 = vmatprep.subr.mxu0 0.0
    %108 = vmatpush1.msra.mxu0 0.0
    %109 = vmatprep.subr.mxu0 0.0
    %110 = vmatpush1.msra.mxu0 0.0
    %111 = vmatprep.subr.mxu0 0.0
    %112 = vmatpush1.msra.mxu0 0.0
    %113 = vmatprep.subr.mxu0 0.0
    %114 = vmatpush1.msra.mxu0 0.0
    %115 = vmatprep.mubr.f32.mxu0 0.0
    %116 = vmatmul.mubr.f32.gmra.mrb[0].mxu0 %v49
    %v117 = vpop.f32.mrb[0].mxu0
    %v118 = vadd.f32 %v45, %v117
    %v119 = vpop.f32.mrb[0].mxu0
    %120 = vdwg.mxu0
    %v121 = vmax.f32 %v118, 0.0
    %v122 = vld [vmem:[%s3] sm:$0xff]
    %v123 = vld [vmem:[%s3 + $0x8] sm:$0xff]
    %v124 = vld [vmem:[%s3 + $0x10] sm:$0xff]
    %v125 = vld [vmem:[%s3 + $0x18] sm:$0xff]
    %v126 = vld [vmem:[%s4] sm:$0x1]
    %v128 = vlaneseq
    %v129 = vshrl.u32 %v128, 7
    %v130 = vsub.s32 0, %v129
    %v131 = vrot.slane %v126, %v130
    %vm133 = vcmask 261120
    %v135 = vsel %vm133, %v121, 0
    %137 = vmatprep.subr.mxu0 0.0
    %138 = vmatpush1.msra.mxu0 %v122
    %139 = vmatprep.subr.mxu0 0.0
    %140 = vmatpush1.msra.mxu0 %v123
    %141 = vmatprep.subr.mxu0 0.0
    %142 = vmatpush1.msra.mxu0 %v124
    %143 = vmatprep.subr.mxu0 0.0
    %144 = vmatpush1.msra.mxu0 %v125
    %145 = vmatprep.subr.mxu0 0.0
    %146 = vmatpush1.msra.mxu0 0.0
    %147 = vmatprep.subr.mxu0 0.0
    %148 = vmatpush1.msra.mxu0 0.0
    %149 = vmatprep.subr.mxu0 0.0
    %150 = vmatpush1.msra.mxu0 0.0
    %151 = vmatprep.subr.mxu0 0.0
    %152 = vmatpush1.msra.mxu0 0.0
    %153 = vmatprep.subr.mxu0 0.0
    %154 = vmatpush1.msra.mxu0 0.0
    %155 = vmatprep.subr.mxu0 0.0
    %156 = vmatpush1.msra.mxu0 0.0
    %157 = vmatprep.subr.mxu0 0.0
    %158 = vmatpush1.msra.mxu0 0.0
    %159 = vmatprep.subr.mxu0 0.0
    %160 = vmatpush1.msra.mxu0 0.0
    %161 = vmatprep.subr.mxu0 0.0
    %162 = vmatpush1.msra.mxu0 0.0
    %163 = vmatprep.subr.mxu0 0.0
    %164 = vmatpush1.msra.mxu0 0.0
    %165 = vmatprep.subr.mxu0 0.0
    %166 = vmatpush1.msra.mxu0 0.0
    %167 = vmatprep.subr.mxu0 0.0
    %168 = vmatpush1.msra.mxu0 0.0
    %169 = vmatprep.subr.mxu0 0.0
    %170 = vmatpush1.msra.mxu0 0.0
    %171 = vmatprep.subr.mxu0 0.0
    %172 = vmatpush1.msra.mxu0 0.0
    %173 = vmatprep.subr.mxu0 0.0
    %174 = vmatpush1.msra.mxu0 0.0
    %175 = vmatprep.subr.mxu0 0.0
    %176 = vmatpush1.msra.mxu0 0.0
    %177 = vmatprep.subr.mxu0 0.0
    %178 = vmatpush1.msra.mxu0 0.0
    %179 = vmatprep.subr.mxu0 0.0
    %180 = vmatpush1.msra.mxu0 0.0
    %181 = vmatprep.subr.mxu0 0.0
    %182 = vmatpush1.msra.mxu0 0.0
    %183 = vmatprep.subr.mxu0 0.0
    %184 = vmatpush1.msra.mxu0 0.0
    %185 = vmatprep.subr.mxu0 0.0
    %186 = vmatpush1.msra.mxu0 0.0
    %187 = vmatprep.subr.mxu0 0.0
    %188 = vmatpush1.msra.mxu0 0.0
    %189 = vmatprep.subr.mxu0 0.0
    %190 = vmatpush1.msra.mxu0 0.0
    %191 = vmatprep.subr.mxu0 0.0
    %192 = vmatpush1.msra.mxu0 0.0
    %193 = vmatprep.subr.mxu0 0.0
    %194 = vmatpush1.msra.mxu0 0.0
    %195 = vmatprep.subr.mxu0 0.0
    %196 = vmatpush1.msra.mxu0 0.0
    %197 = vmatprep.subr.mxu0 0.0
    %198 = vmatpush1.msra.mxu0 0.0
    %199 = vmatprep.subr.mxu0 0.0
    %200 = vmatpush1.msra.mxu0 0.0
    %201 = vmatprep.mubr.f32.mxu0 0.0
    %202 = vmatmul.mubr.f32.gmra.mrb[0].mxu0 %v135
    %v203 = vpop.f32.mrb[0].mxu0
    %v204 = vadd.f32 %v131, %v203
    %v205 = vpop.f32.mrb[0].mxu0
    %206 = vdwg.mxu0
    %v207 = vsel %vm133, %v204, 0.0
    %v208 = vrot.slane %v207, 4
    %v209 = vadd.f32 %v207, %v208
    %v210 = vrot.slane %v209, 2
    %v211 = vadd.f32 %v209, %v210
    %v212 = vrot.slane %v211, 1
    %v213 = vadd.f32 %v211, %v212
    %v214 = vrcp.pop 8.0
    %v215 = vmul.f32 %v213, %v214
    %v216 = vsub.f32 %v204, %v215
    %v217 = vmul.f32 %v216, %v216
    %v218 = vsel %vm133, %v217, 0.0
    %v219 = vrot.slane %v218, 4
    %v220 = vadd.f32 %v218, %v219
    %v221 = vrot.slane %v220, 2
    %v222 = vadd.f32 %v220, %v221
    %v223 = vrot.slane %v222, 1
    %v224 = vadd.f32 %v222, %v223
    %v225 = vmul.f32 %v224, %v214
    %v226 = vadd.f32 %v225, 1e-05
    %v227 = vrsqrt.pop %v226
    %v228 = vld [vmem:[%s5] sm:$0x1]
    %v229 = vmul.f32 %v227, %v228
    %v230 = vlaneseq
    %v231 = vshrl.u32 %v230, 7
    %v232 = vsub.s32 0, %v231
    %v233 = vrot.slane %v229, %v232
    %v234 = vmul.f32 %v216, %v233
    %v235 = vld [vmem:[%s6] sm:$0x1]
    %v237 = vlaneseq
    %v238 = vshrl.u32 %v237, 7
    %v239 = vsub.s32 0, %v238
    %v240 = vrot.slane %v235, %v239
    %v242 = vadd.f32 %v234, %v240
    %v243 = vmax.f32 %v242, 0.0
    %v244 = vld [vmem:[%s7] sm:$0xff]
    %v245 = vld [vmem:[%s7 + $0x8] sm:$0xff]
    %v246 = vld [vmem:[%s7 + $0x10] sm:$0xff]
    %v247 = vld [vmem:[%s7 + $0x18] sm:$0xff]
    %v248 = vld [vmem:[%s8] sm:$0x1]
    %v250 = vlaneseq
    %v251 = vshrl.u32 %v250, 7
    %v252 = vsub.s32 0, %v251
    %v253 = vrot.slane %v248, %v252
    %v256 = vsel %vm133, %v243, 0
    %258 = vmatprep.subr.mxu0 0.0
    %259 = vmatpush1.msra.mxu0 %v244
    %260 = vmatprep.subr.mxu0 0.0
    %261 = vmatpush1.msra.mxu0 %v245
    %262 = vmatprep.subr.mxu0 0.0
    %263 = vmatpush1.msra.mxu0 %v246
    %264 = vmatprep.subr.mxu0 0.0
    %265 = vmatpush1.msra.mxu0 %v247
    %266 = vmatprep.subr.mxu0 0.0
    %267 = vmatpush1.msra.mxu0 0.0
    %268 = vmatprep.subr.mxu0 0.0
    %269 = vmatpush1.msra.mxu0 0.0
    %270 = vmatprep.subr.mxu0 0.0
    %271 = vmatpush1.msra.mxu0 0.0
    %272 = vmatprep.subr.mxu0 0.0
    %273 = vmatpush1.msra.mxu0 0.0
    %274 = vmatprep.subr.mxu0 0.0
    %275 = vmatpush1.msra.mxu0 0.0
    %276 = vmatprep.subr.mxu0 0.0
    %277 = vmatpush1.msra.mxu0 0.0
    %278 = vmatprep.subr.mxu0 0.0
    %279 = vmatpush1.msra.mxu0 0.0
    %280 = vmatprep.subr.mxu0 0.0
    %281 = vmatpush1.msra.mxu0 0.0
    %282 = vmatprep.subr.mxu0 0.0
    %283 = vmatpush1.msra.mxu0 0.0
    %284 = vmatprep.subr.mxu0 0.0
    %285 = vmatpush1.msra.mxu0 0.0
    %286 = vmatprep.subr.mxu0 0.0
    %287 = vmatpush1.msra.mxu0 0.0
    %288 = vmatprep.subr.mxu0 0.0
    %289 = vmatpush1.msra.mxu0 0.0
    %290 = vmatprep.subr.mxu0 0.0
    %291 = vmatpush1.msra.mxu0 0.0
    %292 = vmatprep.subr.mxu0 0.0
    %293 = vmatpush1.msra.mxu0 0.0
    %294 = vmatprep.subr.mxu0 0.0
    %295 = vmatpush1.msra.mxu0 0.0
    %296 = vmatprep.subr.mxu0 0.0
    %297 = vmatpush1.msra.mxu0 0.0
    %298 = vmatprep.subr.mxu0 0.0
    %299 = vmatpush1.msra.mxu0 0.0
    %300 = vmatprep.subr.mxu0 0.0
    %301 = vmatpush1.msra.mxu0 0.0
    %302 = vmatprep.subr.mxu0 0.0
    %303 = vmatpush1.msra.mxu0 0.0
    %304 = vmatprep.subr.mxu0 0.0
    %305 = vmatpush1.msra.mxu0 0.0
    %306 = vmatprep.subr.mxu0 0.0
    %307 = vmatpush1.msra.mxu0 0.0
    %308 = vmatprep.subr.mxu0 0.0
    %309 = vmatpush1.msra.mxu0 0.0
    %310 = vmatprep.subr.mxu0 0.0
    %311 = vmatpush1.msra.mxu0 0.0
    %312 = vmatprep.subr.mxu0 0.0
    %313 = vmatpush1.msra.mxu0 0.0
    %314 = vmatprep.subr.mxu0 0.0
    %315 = vmatpush1.msra.mxu0 0.0
    %316 = vmatprep.subr.mxu0 0.0
    %317 = vmatpush1.msra.mxu0 0.0
    %318 = vmatprep.subr.mxu0 0.0
    %319 = vmatpush1.msra.mxu0 0.0
    %320 = vmatprep.subr.mxu0 0.0
    %321 = vmatpush1.msra.mxu0 0.0
    %322 = vmatprep.mubr.f32.mxu0 0.0
    %323 = vmatmul.mubr.f32.gmra.mrb[0].mxu0 %v256
    %v324 = vpop.f32.mrb[0].mxu0
    %v325 = vadd.f32 %v253, %v324
    %v326 = vpop.f32.mrb[0].mxu0
    %327 = vdwg.mxu0
    %v328 = vxor.u32 %v325, 2147483648
    %v329 = vmul.f32 %v328, 1.442695
    %v330 = vpow.pop %v329
    %v331 = vadd.f32 %v330, 1.0
    %v332 = vrcp.pop %v331
    %v333 = vmul.f32 1.0, %v332
    %334 = vst.msk [vmem:[#allocation2] sm:$0xff] %vm47, %v333
    // Predicated region
    $region38: #{tpu_custom_call.1} parent=1 // pred_check
      _
    $region39: #{tpu_custom_call.1} parent=1 // pred_check_branch
      %336 = sbr.rel (0) target = $region41
    $region40: #{tpu_custom_call.1} parent=1 // pred_region
      %s338 = ssub.s32 128, 128
      %339 = vsyncadd [#allocation3], %s338
      %s341 = sshll.u32 [#allocation2], 4
      %s342 = int_to_ptr.vmem [resolvable:$true] %s341
      %344 = dma.vmem_to_hbm [thread:$0]  %s342, 128, %s9, [#allocation3]
    $region41: #{tpu_custom_call.1} parent=1 // pred_fallthru
      _
    // Predicated region
    $region42: #{tpu_custom_call.1} parent=1 // pred_check
      _
    $region43: #{tpu_custom_call.1} parent=1 // pred_check_branch
      %346 = sbr.rel (0) target = $region45
    $region44: #{tpu_custom_call.1} parent=1 // pred_region
      %347 = dma.done [#allocation3], 128
    $region45: #{tpu_custom_call.1} parent=1 // pred_fallthru
      _
    %348 = vsyncpa [#allocation3], 1

</llo_original>
